<compile_context>
chip_gen: v5e
topology: v5e:2x2
jax: 0.10.0
libtpu: 0.0.40
codegen_flags: <defaults>
</compile_context>

<pallas_src>
import functools

import jax
import jax.numpy as jnp
from jax.experimental import pallas as pl
from jax.experimental.pallas import tpu as pltpu

EPS = 1e-5
FPAD = 128  # lane-dense padded feature width (lane minimum)


def _gcn_encoder_kernel(x_ref, adj_ref, w1_ref, w2_ref, prm_ref, out_ref, *, k, n):
    """One grid step = k row-stacked samples.

    x_ref   (k*n, MV)    stacked node features (row-stacked for MXU fill)
    adj_ref (k, n, n)    raw adjacency (no self loops; diag fixed in-kernel)
    w1_ref  (MV, FPAD)   zero-padded W1
    w2_ref  (FPAD, FPAD) zero-padded W2
    prm_ref (8, FPAD)    packed rows [gamma1, beta1, b1, gamma2, beta2, b2, 0, 0]
    out_ref (k*n, FPAD)  stacked output (first c lanes are real)
    """
    prm = prm_ref[...]
    gamma1, beta1, b1 = prm[0:1, :], prm[1:2, :], prm[2:3, :]
    gamma2, beta2, b2 = prm[3:4, :], prm[4:5, :], prm[5:6, :]

    # --- self loops (diag set to 1) + symmetric degree normalization ---------
    row = jax.lax.broadcasted_iota(jnp.int32, (k, n, n), 1)
    col = jax.lax.broadcasted_iota(jnp.int32, (k, n, n), 2)
    adj = jnp.where(row == col, 1.0, adj_ref[...])                   # (k, n, n)
    deg = jnp.maximum(jnp.sum(adj, axis=-1, keepdims=True), 1.0)     # (k, n, 1)
    dis = jax.lax.rsqrt(deg)                                         # (k, n, 1)

    def propagate(h):  # (k, n, F) -> (k, n, F) ; == (D^-1/2 Â D^-1/2) @ h
        return dis * jnp.einsum("bij,bjf->bif", adj, dis * h,
                                preferred_element_type=jnp.float32)

    def batchnorm(h, gamma, beta):  # per-sample BN over node axis, training mode
        mu = jnp.mean(h, axis=1, keepdims=True)
        var = jnp.mean(jnp.square(h - mu), axis=1, keepdims=True)    # two-pass
        return gamma * (h - mu) * jax.lax.rsqrt(var + EPS) + beta

    # ---- layer 1: DenseGCNConv(mv -> mv_); projection stacked over samples --
    h = jnp.dot(x_ref[...], w1_ref[...], preferred_element_type=jnp.float32)
    h = propagate(h.reshape(k, n, FPAD)) + b1
    h = jnp.maximum(batchnorm(h, gamma1, beta1), 0.0)                # BN1 + ReLU
    # ---- layer 2: DenseGCNConv(mv_ -> c) -----------------------------------
    h = jnp.dot(h.reshape(k * n, FPAD), w2_ref[...],
                preferred_element_type=jnp.float32)
    h = propagate(h.reshape(k, n, FPAD)) + b2
    out_ref[...] = batchnorm(h, gamma2, beta2).reshape(k * n, FPAD)  # BN2


def gcn_encoder_sdimc(x, a, params):
    """x: (B, N, mv) node features, a: (B, N, N) adjacency (no self loops needed)."""
    B, N, MV = x.shape
    mv_ = params["w1"].shape[1]
    c = params["w2"].shape[1]

    # Collapse the batch into as few grid steps as possible (per-step overhead
    # dominates at this size), but keep 2 "parallel" steps so both v7x TCs work.
    num_steps = 2 if (B >= 2 and B % 2 == 0) else 1
    if num_steps == 2 and ((B // 2) * N) % 8 != 0:
        num_steps = 1  # keep the stacked-row block sublane-aligned
    k = B // num_steps

    # Zero-padded lane-dense parameter slabs.  NOTE: the zero pads are what keep
    # the padded output lanes identically zero through both BatchNorms
    # (W/b pads = 0 -> h pad = 0 -> (h - mu) = 0 -> gamma*0 + beta_pad(=0) = 0).
    w1p = jnp.zeros((MV, FPAD), jnp.float32).at[:, :mv_].set(params["w1"])
    w2p = jnp.zeros((FPAD, FPAD), jnp.float32).at[:mv_, :c].set(params["w2"])
    prm = jnp.zeros((8, FPAD), jnp.float32)
    prm = prm.at[0, :mv_].set(params["gamma1"])
    prm = prm.at[1, :mv_].set(params["beta1"])
    prm = prm.at[2, :mv_].set(params["b1"])
    prm = prm.at[3, :c].set(params["gamma2"])
    prm = prm.at[4, :c].set(params["beta2"])
    prm = prm.at[5, :c].set(params["b2"])

    # Row-stack samples so the projection matmuls see M = k*N MXU rows.
    x_rows = x.reshape(B * N, MV)

    kernel = functools.partial(_gcn_encoder_kernel, k=k, n=N)

    flops = B * (2 * N * MV * FPAD            # x @ W1
                 + 2 * N * FPAD * FPAD        # h @ W2
                 + 2 * (2 * N * N * FPAD)     # two adjacency propagations
                 + 16 * N * FPAD)             # BN / ReLU / scalings
    bytes_accessed = 4 * (x.size + a.size + w1p.size + w2p.size + prm.size
                          + B * N * FPAD)

    out = pl.pallas_call(
        kernel,
        out_shape=jax.ShapeDtypeStruct((B * N, FPAD), jnp.float32),
        grid=(num_steps,),
        in_specs=[
            pl.BlockSpec((k * N, MV), lambda s: (s, 0)),     # stacked x
            pl.BlockSpec((k, N, N), lambda s: (s, 0, 0)),    # adjacency (per step)
            pl.BlockSpec((MV, FPAD), lambda s: (0, 0)),      # W1 (resident)
            pl.BlockSpec((FPAD, FPAD), lambda s: (0, 0)),    # W2 (resident)
            pl.BlockSpec((8, FPAD), lambda s: (0, 0)),       # packed params
        ],
        out_specs=pl.BlockSpec((k * N, FPAD), lambda s: (s, 0)),
        compiler_params=pltpu.CompilerParams(
            dimension_semantics=("parallel",)),
        cost_estimate=pl.CostEstimate(
            flops=int(flops),
            transcendentals=int(B * (N + 2 * FPAD)),
            bytes_accessed=int(bytes_accessed)),
    )(x_rows, a, w1p, w2p, prm)

    return out[:, :c].reshape(B, N, c)   # drop the lane padding


def reference_forward(x, a, params):
    """Pure-JAX mirror of the PyTorch forward, vmapped over the batch."""
    def single(xi, ai):
        n = ai.shape[0]
        adj = ai.at[jnp.arange(n), jnp.arange(n)].set(1.0)
        d = jnp.maximum(adj.sum(-1), 1.0) ** -0.5
        adj_n = d[:, None] * adj * d[None, :]

        def bn(h, gamma, beta):
            mu = h.mean(0, keepdims=True)
            var = ((h - mu) ** 2).mean(0, keepdims=True)
            return gamma * (h - mu) / jnp.sqrt(var + EPS) + beta

        h = adj_n @ (xi @ params["w1"]) + params["b1"]
        h = jax.nn.relu(bn(h, params["gamma1"], params["beta1"]))
        h = adj_n @ (h @ params["w2"]) + params["b2"]
        return bn(h, params["gamma2"], params["beta2"])

    return jax.vmap(single)(x, a)


def make_params(key, mv, c):
    mv_ = int(round(0.8 * mv))
    k = jax.random.split(key, 6)
    g1 = (6.0 / (mv + mv_)) ** 0.5
    g2 = (6.0 / (mv_ + c)) ** 0.5
    return {
        # DenseGCNConv: glorot weights, zero bias (PyG init)
        "w1": jax.random.uniform(k[0], (mv, mv_), jnp.float32, -g1, g1),
        "b1": jnp.zeros((mv_,), jnp.float32),
        "w2": jax.random.uniform(k[1], (mv_, c), jnp.float32, -g2, g2),
        "b2": jnp.zeros((c,), jnp.float32),
        # BatchNorm affine params, perturbed from the default 1/0 so the check
        # is non-trivial but deterministic
        "gamma1": 1.0 + 0.1 * jax.random.normal(k[2], (mv_,), jnp.float32),
        "beta1": 0.1 * jax.random.normal(k[3], (mv_,), jnp.float32),
        "gamma2": 1.0 + 0.1 * jax.random.normal(k[4], (c,), jnp.float32),
        "beta2": 0.1 * jax.random.normal(k[5], (c,), jnp.float32),
    }


if __name__ == "__main__":
    key = jax.random.PRNGKey(0)
    B, N, MV, C = 4, 16, 32, 8          # samples/views, nodes, view_dim, clusterNum

    kx, ks, kp = jax.random.split(key, 3)
    x = jax.random.normal(kx, (B, N, MV), jnp.float32)
    s_raw = jax.random.uniform(ks, (B, N, N), jnp.float32)
    a = (s_raw > 0.6).astype(jnp.float32)          # sparse-ish adjacency

    params = make_params(kp, MV, C)

    out = gcn_encoder_sdimc(x, a, params)
    out = jax.block_until_ready(out)

    ref = reference_forward(x, a, params)
    assert out.shape == (B, N, C), out.shape
    assert jnp.allclose(out, ref, atol=1e-4, rtol=1e-4), (
        float(jnp.max(jnp.abs(out - ref))))
    print("KERNEL_OK")
</pallas_src>

<mosaic_0001>
module attributes {stable_mosaic.version = 11 : i64} {
  func.func @_gcn_encoder_kernel(%arg0: i32, %arg1: memref<32x32xf32, #tpu.memory_space<vmem>>, %arg2: memref<2x16x16xf32, #tpu.memory_space<vmem>>, %arg3: memref<32x128xf32, #tpu.memory_space<vmem>>, %arg4: memref<128x128xf32, #tpu.memory_space<vmem>>, %arg5: memref<8x128xf32, #tpu.memory_space<vmem>>, %arg6: memref<32x128xf32, #tpu.memory_space<vmem>>) attributes {dimension_semantics = [#tpu.dimension_semantics<parallel>], iteration_bounds = array<i64: 2>, scalar_prefetch = 0 : i64, scratch_operands = 0 : i64, tpu.core_type = #tpu.core_type<tc>, window_params = [{transform_indices = @transform_0, window_bounds = array<i64: 32, 32>}, {transform_indices = @transform_1, window_bounds = array<i64: 2, 16, 16>}, {pipeline_mode = #tpu.pipeline_mode<synchronous>, transform_indices = @transform_2, window_bounds = array<i64: 32, 128>}, {pipeline_mode = #tpu.pipeline_mode<synchronous>, transform_indices = @transform_3, window_bounds = array<i64: 128, 128>}, {pipeline_mode = #tpu.pipeline_mode<synchronous>, transform_indices = @transform_4, window_bounds = array<i64: 8, 128>}, {transform_indices = @transform_5, window_bounds = array<i64: 32, 128>}]} {
    %c0 = arith.constant 0 : index
    %c0_0 = arith.constant 0 : index
    %0 = vector.load %arg5[%c0, %c0_0] : memref<8x128xf32, #tpu.memory_space<vmem>>, vector<8x128xf32>
    %1 = vector.extract_strided_slice %0 {offsets = [0, 0], sizes = [1, 128], strides = [1, 1]} : vector<8x128xf32> to vector<1x128xf32>
    %2 = vector.extract_strided_slice %0 {offsets = [1, 0], sizes = [1, 128], strides = [1, 1]} : vector<8x128xf32> to vector<1x128xf32>
    %3 = vector.extract_strided_slice %0 {offsets = [2, 0], sizes = [1, 128], strides = [1, 1]} : vector<8x128xf32> to vector<1x128xf32>
    %4 = vector.extract_strided_slice %0 {offsets = [3, 0], sizes = [1, 128], strides = [1, 1]} : vector<8x128xf32> to vector<1x128xf32>
    %5 = vector.extract_strided_slice %0 {offsets = [4, 0], sizes = [1, 128], strides = [1, 1]} : vector<8x128xf32> to vector<1x128xf32>
    %6 = vector.extract_strided_slice %0 {offsets = [5, 0], sizes = [1, 128], strides = [1, 1]} : vector<8x128xf32> to vector<1x128xf32>
    %7 = tpu.iota {dimensions = array<i32: 1>} : vector<2x16x16xi32>
    %8 = tpu.iota {dimensions = array<i32: 2>} : vector<2x16x16xi32>
    %9 = arith.cmpi eq, %7, %8 : vector<2x16x16xi32>
    %c0_1 = arith.constant 0 : index
    %c0_2 = arith.constant 0 : index
    %c0_3 = arith.constant 0 : index
    %10 = vector.load %arg2[%c0_1, %c0_2, %c0_3] : memref<2x16x16xf32, #tpu.memory_space<vmem>>, vector<2x16x16xf32>
    %cst = arith.constant 1.000000e+00 : f32
    %11 = vector.broadcast %cst : f32 to vector<2x16x16xf32>
    %12 = arith.select %9, %11, %10 : vector<2x16x16xi1>, vector<2x16x16xf32>
    %cst_4 = arith.constant dense<0.000000e+00> : vector<2x16xf32>
    %13 = vector.multi_reduction <add>, %12, %cst_4 [2] : vector<2x16x16xf32> to vector<2x16xf32>
    %14 = vector.shape_cast %13 : vector<2x16xf32> to vector<2x16x1xf32>
    %cst_5 = arith.constant 1.000000e+00 : f32
    %15 = vector.broadcast %cst_5 : f32 to vector<2x16x1xf32>
    %16 = arith.maximumf %14, %15 : vector<2x16x1xf32>
    %17 = math.rsqrt %16 : vector<2x16x1xf32>
    %c0_6 = arith.constant 0 : index
    %c0_7 = arith.constant 0 : index
    %18 = vector.load %arg1[%c0_6, %c0_7] : memref<32x32xf32, #tpu.memory_space<vmem>>, vector<32x32xf32>
    %c0_8 = arith.constant 0 : index
    %c0_9 = arith.constant 0 : index
    %19 = vector.load %arg3[%c0_8, %c0_9] : memref<32x128xf32, #tpu.memory_space<vmem>>, vector<32x128xf32>
    %cst_10 = arith.constant dense<0.000000e+00> : vector<32x128xf32>
    %20 = tpu.matmul %18, %19, %cst_10 {dimension_numbers = #tpu.dot_dimension_numbers<[1], [0], [0], [1], [0, 0, 1, 1], [], []>} : vector<32x32xf32>, vector<32x128xf32>, vector<32x128xf32> -> vector<32x128xf32>
    %21 = vector.shape_cast %20 : vector<32x128xf32> to vector<2x16x128xf32>
    %22 = vector.broadcast %17 : vector<2x16x1xf32> to vector<2x16x128xf32>
    %23 = arith.mulf %22, %21 : vector<2x16x128xf32>
    "tpu.trace_start"() <{level = 10 : i32, message = "bij,bjf->bif"}> : () -> ()
    %cst_11 = arith.constant dense<0.000000e+00> : vector<2x16x128xf32>
    %24 = tpu.matmul %12, %23, %cst_11 {dimension_numbers = #tpu.dot_dimension_numbers<[2], [1], [1], [2], [0, 0, 0, 1, 1, 2], [0], [0]>} : vector<2x16x16xf32>, vector<2x16x128xf32>, vector<2x16x128xf32> -> vector<2x16x128xf32>
    "tpu.trace_stop"() : () -> ()
    %25 = vector.broadcast %17 : vector<2x16x1xf32> to vector<2x16x128xf32>
    %26 = arith.mulf %25, %24 : vector<2x16x128xf32>
    %27 = vector.shape_cast %3 : vector<1x128xf32> to vector<1x1x128xf32>
    %28 = vector.broadcast %27 : vector<1x1x128xf32> to vector<2x16x128xf32>
    %29 = arith.addf %26, %28 : vector<2x16x128xf32>
    %cst_12 = arith.constant dense<0.000000e+00> : vector<2x128xf32>
    %30 = vector.multi_reduction <add>, %29, %cst_12 [1] : vector<2x16x128xf32> to vector<2x128xf32>
    %31 = vector.shape_cast %30 : vector<2x128xf32> to vector<2x1x128xf32>
    %cst_13 = arith.constant 1.600000e+01 : f32
    %32 = vector.broadcast %cst_13 : f32 to vector<2x1x128xf32>
    %33 = arith.divf %31, %32 : vector<2x1x128xf32>
    %34 = vector.broadcast %33 : vector<2x1x128xf32> to vector<2x16x128xf32>
    %35 = arith.subf %29, %34 : vector<2x16x128xf32>
    %36 = arith.mulf %35, %35 : vector<2x16x128xf32>
    %cst_14 = arith.constant dense<0.000000e+00> : vector<2x128xf32>
    %37 = vector.multi_reduction <add>, %36, %cst_14 [1] : vector<2x16x128xf32> to vector<2x128xf32>
    %38 = vector.shape_cast %37 : vector<2x128xf32> to vector<2x1x128xf32>
    %cst_15 = arith.constant 1.600000e+01 : f32
    %39 = vector.broadcast %cst_15 : f32 to vector<2x1x128xf32>
    %40 = arith.divf %38, %39 : vector<2x1x128xf32>
    %41 = vector.broadcast %33 : vector<2x1x128xf32> to vector<2x16x128xf32>
    %42 = arith.subf %29, %41 : vector<2x16x128xf32>
    %43 = vector.shape_cast %1 : vector<1x128xf32> to vector<1x1x128xf32>
    %44 = vector.broadcast %43 : vector<1x1x128xf32> to vector<2x16x128xf32>
    %45 = arith.mulf %44, %42 : vector<2x16x128xf32>
    %cst_16 = arith.constant 9.99999974E-6 : f32
    %46 = vector.broadcast %cst_16 : f32 to vector<2x1x128xf32>
    %47 = arith.addf %40, %46 : vector<2x1x128xf32>
    %48 = math.rsqrt %47 : vector<2x1x128xf32>
    %49 = vector.broadcast %48 : vector<2x1x128xf32> to vector<2x16x128xf32>
    %50 = arith.mulf %45, %49 : vector<2x16x128xf32>
    %51 = vector.shape_cast %2 : vector<1x128xf32> to vector<1x1x128xf32>
    %52 = vector.broadcast %51 : vector<1x1x128xf32> to vector<2x16x128xf32>
    %53 = arith.addf %50, %52 : vector<2x16x128xf32>
    %cst_17 = arith.constant 0.000000e+00 : f32
    %54 = vector.broadcast %cst_17 : f32 to vector<2x16x128xf32>
    %55 = arith.maximumf %53, %54 : vector<2x16x128xf32>
    %56 = vector.shape_cast %55 : vector<2x16x128xf32> to vector<32x128xf32>
    %c0_18 = arith.constant 0 : index
    %c0_19 = arith.constant 0 : index
    %57 = vector.load %arg4[%c0_18, %c0_19] : memref<128x128xf32, #tpu.memory_space<vmem>>, vector<128x128xf32>
    %cst_20 = arith.constant dense<0.000000e+00> : vector<32x128xf32>
    %58 = tpu.matmul %56, %57, %cst_20 {dimension_numbers = #tpu.dot_dimension_numbers<[1], [0], [0], [1], [0, 0, 1, 1], [], []>} : vector<32x128xf32>, vector<128x128xf32>, vector<32x128xf32> -> vector<32x128xf32>
    %59 = vector.shape_cast %58 : vector<32x128xf32> to vector<2x16x128xf32>
    %60 = vector.broadcast %17 : vector<2x16x1xf32> to vector<2x16x128xf32>
    %61 = arith.mulf %60, %59 : vector<2x16x128xf32>
    "tpu.trace_start"() <{level = 10 : i32, message = "bij,bjf->bif"}> : () -> ()
    %cst_21 = arith.constant dense<0.000000e+00> : vector<2x16x128xf32>
    %62 = tpu.matmul %12, %61, %cst_21 {dimension_numbers = #tpu.dot_dimension_numbers<[2], [1], [1], [2], [0, 0, 0, 1, 1, 2], [0], [0]>} : vector<2x16x16xf32>, vector<2x16x128xf32>, vector<2x16x128xf32> -> vector<2x16x128xf32>
    "tpu.trace_stop"() : () -> ()
    %63 = vector.broadcast %17 : vector<2x16x1xf32> to vector<2x16x128xf32>
    %64 = arith.mulf %63, %62 : vector<2x16x128xf32>
    %65 = vector.shape_cast %6 : vector<1x128xf32> to vector<1x1x128xf32>
    %66 = vector.broadcast %65 : vector<1x1x128xf32> to vector<2x16x128xf32>
    %67 = arith.addf %64, %66 : vector<2x16x128xf32>
    %cst_22 = arith.constant dense<0.000000e+00> : vector<2x128xf32>
    %68 = vector.multi_reduction <add>, %67, %cst_22 [1] : vector<2x16x128xf32> to vector<2x128xf32>
    %69 = vector.shape_cast %68 : vector<2x128xf32> to vector<2x1x128xf32>
    %cst_23 = arith.constant 1.600000e+01 : f32
    %70 = vector.broadcast %cst_23 : f32 to vector<2x1x128xf32>
    %71 = arith.divf %69, %70 : vector<2x1x128xf32>
    %72 = vector.broadcast %71 : vector<2x1x128xf32> to vector<2x16x128xf32>
    %73 = arith.subf %67, %72 : vector<2x16x128xf32>
    %74 = arith.mulf %73, %73 : vector<2x16x128xf32>
    %cst_24 = arith.constant dense<0.000000e+00> : vector<2x128xf32>
    %75 = vector.multi_reduction <add>, %74, %cst_24 [1] : vector<2x16x128xf32> to vector<2x128xf32>
    %76 = vector.shape_cast %75 : vector<2x128xf32> to vector<2x1x128xf32>
    %cst_25 = arith.constant 1.600000e+01 : f32
    %77 = vector.broadcast %cst_25 : f32 to vector<2x1x128xf32>
    %78 = arith.divf %76, %77 : vector<2x1x128xf32>
    %79 = vector.broadcast %71 : vector<2x1x128xf32> to vector<2x16x128xf32>
    %80 = arith.subf %67, %79 : vector<2x16x128xf32>
    %81 = vector.shape_cast %4 : vector<1x128xf32> to vector<1x1x128xf32>
    %82 = vector.broadcast %81 : vector<1x1x128xf32> to vector<2x16x128xf32>
    %83 = arith.mulf %82, %80 : vector<2x16x128xf32>
    %cst_26 = arith.constant 9.99999974E-6 : f32
    %84 = vector.broadcast %cst_26 : f32 to vector<2x1x128xf32>
    %85 = arith.addf %78, %84 : vector<2x1x128xf32>
    %86 = math.rsqrt %85 : vector<2x1x128xf32>
    %87 = vector.broadcast %86 : vector<2x1x128xf32> to vector<2x16x128xf32>
    %88 = arith.mulf %83, %87 : vector<2x16x128xf32>
    %89 = vector.shape_cast %5 : vector<1x128xf32> to vector<1x1x128xf32>
    %90 = vector.broadcast %89 : vector<1x1x128xf32> to vector<2x16x128xf32>
    %91 = arith.addf %88, %90 : vector<2x16x128xf32>
    %92 = vector.shape_cast %91 : vector<2x16x128xf32> to vector<32x128xf32>
    %c0_27 = arith.constant 0 : index
    %c0_28 = arith.constant 0 : index
    %93 = vector.load %arg6[%c0_27, %c0_28] : memref<32x128xf32, #tpu.memory_space<vmem>>, vector<32x128xf32>
    tpu.vector_store %arg6[%c0_27, %c0_28], %92 {strides = array<i32>} : memref<32x128xf32, #tpu.memory_space<vmem>>, vector<32x128xf32>,
    return
  }
  func.func @transform_0(%arg0: i32) -> (i32, i32) {
    %c0_i32 = arith.constant 0 : i32
    %c0_i32_0 = arith.constant 0 : i32
    return %arg0, %c0_i32 : i32, i32
  }
  func.func @transform_1(%arg0: i32) -> (i32, i32, i32) {
    %c0_i32 = arith.constant 0 : i32
    %c0_i32_0 = arith.constant 0 : i32
    %c0_i32_1 = arith.constant 0 : i32
    return %arg0, %c0_i32, %c0_i32_0 : i32, i32, i32
  }
  func.func @transform_2(%arg0: i32) -> (i32, i32) {
    %c0_i32 = arith.constant 0 : i32
    %c0_i32_0 = arith.constant 0 : i32
    %c0_i32_1 = arith.constant 0 : i32
    return %c0_i32, %c0_i32_0 : i32, i32
  }
  func.func @transform_3(%arg0: i32) -> (i32, i32) {
    %c0_i32 = arith.constant 0 : i32
    %c0_i32_0 = arith.constant 0 : i32
    %c0_i32_1 = arith.constant 0 : i32
    return %c0_i32, %c0_i32_0 : i32, i32
  }
  func.func @transform_4(%arg0: i32) -> (i32, i32) {
    %c0_i32 = arith.constant 0 : i32
    %c0_i32_0 = arith.constant 0 : i32
    %c0_i32_1 = arith.constant 0 : i32
    return %c0_i32, %c0_i32_0 : i32, i32
  }
  func.func @transform_5(%arg0: i32) -> (i32, i32) {
    %c0_i32 = arith.constant 0 : i32
    %c0_i32_0 = arith.constant 0 : i32
    return %arg0, %c0_i32 : i32, i32
  }
}

</mosaic_0001>

<llo_original>
// kernel: tpu_custom_call.1
$region0: #{tpu_custom_call.1}
  #allocation0 [shape = 'u32[]', space=smem, size = 0x4, offset = 0x4, fixed_abs, tag = 'smem constant byte address 0x4 - core index']
  #allocation1 [shape = 'u32[72,128]{1,0:T(1,128)}', space=vmem, size = 0x9000, scoped, tag = 'internal scratch']
  %s0 = inlined_call_operand.vmem [shape: f32[64,32], index: 0, kind: input, shape index: {}]
  %s1 = inlined_call_operand.vmem [shape: f32[4,16,16], index: 1, kind: input, shape index: {}]
  %s2 = inlined_call_operand.vmem [shape: f32[32,128], index: 2, kind: input, shape index: {}]
  %s3 = inlined_call_operand.hbm [shape: f32[128,128], index: 3, kind: input, shape index: {}]
  %s4 = inlined_call_operand.hbm [shape: f32[8,128], index: 4, kind: input, shape index: {}]
  %s5 = inlined_call_operand.hbm [shape: f32[64,128], index: 5, kind: output, shape index: {}]
  %s6 = sld [smem:[#allocation0]]
  $region61: #{tpu_custom_call.1} parent=0
    _
  %s8 = ssub.s32 1, %s6
  %s9 = scalar_select 0, %s8, %s6
  $region1: #{tpu_custom_call.1} parent=0
    #allocation2 [shape = 'u8[65536]{0}', space=vmem, size = 0x10000, scoped, tag = 'input window, operand 3, single buffered']
    #allocation3 [shape = 's32[2]{0}', space=sflag, size = 0x8, scoped, tag = 'scoped memory for tpu_custom_call.1']
    #allocation4 [shape = 's32[2]{0}', space=sflag, size = 0x8, scoped, tag = 'scoped memory for tpu_custom_call.1']
    #allocation5 [shape = 'u8[4096]{0}', space=vmem, size = 0x1000, scoped, tag = 'input window, operand 4, single buffered']
    #allocation6 [shape = 's32[1]{0}', space=sflag, size = 0x4, scoped, tag = 'scoped memory for tpu_custom_call.1']
    #allocation7 [shape = 'u8[32768]{0}', space=vmem, size = 0x8000, scoped, tag = 'output window, operand 0']
    %10 = vsyncpa [#allocation3], 0
    %11 = vsyncpa [#allocation6], 0
    %12 = vsyncpa [#allocation4], 0
    %s13 = scalar_lea.sflag [#allocation4], 1
    %14 = vsyncpa %s13, 0
    loop: start=0, step=1, limit=4
    $region2: #{tpu_custom_call.1} parent=1 // loop_pre_header
      _
    $region3: #{tpu_custom_call.1} parent=1 // loop_header
      %s16 = sphi 0, %s20
      %p17 = scmp.ge.s32.totalorder %s16, 4
      %s26 = sphi 0, %s28
      %s29 = sphi 0, %s26
      %s30 = sphi 0, %s29
      %s46 = sphi 0, %s30
      %s52 = sphi 0, %s54
      %s55 = sphi 0, %s52
      %s56 = sphi 0, %s55
      %s72 = sphi 0, %s56
      %s76 = sphi 0, %s76
      %s78 = sphi 0, %s76
      %s79 = sphi 0, %s78
      %s93 = sphi 0, %s79
      %s97 = sphi 0, %s97
      %s99 = sphi 0, %s97
      %s100 = sphi 0, %s99
      %s114 = sphi 0, %s100
      %s118 = sphi 0, %s118
      %s120 = sphi 0, %s118
      %s121 = sphi 0, %s120
      %s135 = sphi 0, %s121
      %s141 = sphi 0, %s143
      %s144 = sphi 0, %s141
      %s145 = sphi 0, %s144
      %s161 = sphi 0, %s145
    $region4: #{tpu_custom_call.1} parent=1 // loop_header_branch
      %19 = sbr.rel (%p17) target = $region8
    $region5: #{tpu_custom_call.1} parent=1 // loop_body
      %s21 = ssub.s32 %s16, 1
      %s22 = ssub.s32 %s16, 2
      %s23 = sadd.s32 %s16, 1
      %s24 = ssub.s32 %s16, %s23
      %p25 = scmp.eq.s32.totalorder %s24, 0
      %s27 = sadd.s32 %s26, 1
      %s28 = scalar_select %p25, %s26, %s27
      %p31 = pneg %p25
      %p32 = scmp.eq.s32.totalorder %s16, 1
      %p33 = por %p31, %p32
      %p34 = scmp.ne.s32.totalorder %s26, %s29
      %p35 = scmp.eq.s32.totalorder %s16, 0
      %p36 = por %p34, %p35
      %p37 = scmp.ne.s32.totalorder %s26, %s29
      %p38 = scmp.eq.s32.totalorder %s21, 1
      %p39 = por %p37, %p38
      %p40 = scmp.ne.s32.totalorder %s29, %s30
      %p41 = scmp.eq.s32.totalorder %s21, 0
      %p42 = por %p40, %p41
      %p43 = scmp.ne.s32.totalorder %s29, %s30
      %p44 = scmp.eq.s32.totalorder %s22, 1
      %p45 = por %p43, %p44
      %p47 = scmp.ne.s32.totalorder %s30, %s46
      %p48 = scmp.eq.s32.totalorder %s22, 0
      %p49 = por %p47, %p48
      %s50 = ssub.s32 %s16, %s23
      %p51 = scmp.eq.s32.totalorder %s50, 0
      %s53 = sadd.s32 %s52, 1
      %s54 = scalar_select %p51, %s52, %s53
      %p57 = pneg %p51
      %p58 = scmp.eq.s32.totalorder %s16, 1
      %p59 = por %p57, %p58
      %p60 = scmp.ne.s32.totalorder %s52, %s55
      %p61 = scmp.eq.s32.totalorder %s16, 0
      %p62 = por %p60, %p61
      %p63 = scmp.ne.s32.totalorder %s52, %s55
      %p64 = scmp.eq.s32.totalorder %s21, 1
      %p65 = por %p63, %p64
      %p66 = scmp.ne.s32.totalorder %s55, %s56
      %p67 = scmp.eq.s32.totalorder %s21, 0
      %p68 = por %p66, %p67
      %p69 = scmp.ne.s32.totalorder %s55, %s56
      %p70 = scmp.eq.s32.totalorder %s22, 1
      %p71 = por %p69, %p70
      %p73 = scmp.ne.s32.totalorder %s56, %s72
      %p74 = scmp.eq.s32.totalorder %s22, 0
      %p75 = por %p73, %p74
      %s77 = sadd.s32 %s76, 1
      %p80 = scmp.eq.s32.totalorder %s16, 1
      %p81 = scmp.ne.s32.totalorder %s76, %s78
      %p82 = scmp.eq.s32.totalorder %s16, 0
      %p83 = por %p81, %p82
      %p84 = scmp.ne.s32.totalorder %s76, %s78
      %p85 = scmp.eq.s32.totalorder %s21, 1
      %p86 = por %p84, %p85
      %p87 = scmp.ne.s32.totalorder %s78, %s79
      %p88 = scmp.eq.s32.totalorder %s21, 0
      %p89 = por %p87, %p88
      %p90 = scmp.ne.s32.totalorder %s78, %s79
      %p91 = scmp.eq.s32.totalorder %s22, 1
      %p92 = por %p90, %p91
      %p94 = scmp.ne.s32.totalorder %s79, %s93
      %p95 = scmp.eq.s32.totalorder %s22, 0
      %p96 = por %p94, %p95
      %s98 = sadd.s32 %s97, 1
      %p101 = scmp.eq.s32.totalorder %s16, 1
      %p102 = scmp.ne.s32.totalorder %s97, %s99
      %p103 = scmp.eq.s32.totalorder %s16, 0
      %p104 = por %p102, %p103
      %p105 = scmp.ne.s32.totalorder %s97, %s99
      %p106 = scmp.eq.s32.totalorder %s21, 1
      %p107 = por %p105, %p106
      %p108 = scmp.ne.s32.totalorder %s99, %s100
      %p109 = scmp.eq.s32.totalorder %s21, 0
      %p110 = por %p108, %p109
      %p111 = scmp.ne.s32.totalorder %s99, %s100
      %p112 = scmp.eq.s32.totalorder %s22, 1
      %p113 = por %p111, %p112
      %p115 = scmp.ne.s32.totalorder %s100, %s114
      %p116 = scmp.eq.s32.totalorder %s22, 0
      %p117 = por %p115, %p116
      %s119 = sadd.s32 %s118, 1
      %p122 = scmp.eq.s32.totalorder %s16, 1
      %p123 = scmp.ne.s32.totalorder %s118, %s120
      %p124 = scmp.eq.s32.totalorder %s16, 0
      %p125 = por %p123, %p124
      %p126 = scmp.ne.s32.totalorder %s118, %s120
      %p127 = scmp.eq.s32.totalorder %s21, 1
      %p128 = por %p126, %p127
      %p129 = scmp.ne.s32.totalorder %s120, %s121
      %p130 = scmp.eq.s32.totalorder %s21, 0
      %p131 = por %p129, %p130
      %p132 = scmp.ne.s32.totalorder %s120, %s121
      %p133 = scmp.eq.s32.totalorder %s22, 1
      %p134 = por %p132, %p133
      %p136 = scmp.ne.s32.totalorder %s121, %s135
      %p137 = scmp.eq.s32.totalorder %s22, 0
      %p138 = por %p136, %p137
      %s139 = ssub.s32 %s16, %s23
      %p140 = scmp.eq.s32.totalorder %s139, 0
      %s142 = sadd.s32 %s141, 1
      %s143 = scalar_select %p140, %s141, %s142
      %p146 = pneg %p140
      %p147 = scmp.eq.s32.totalorder %s16, 1
      %p148 = por %p146, %p147
      %p149 = scmp.ne.s32.totalorder %s141, %s144
      %p150 = scmp.eq.s32.totalorder %s16, 0
      %p151 = por %p149, %p150
      %p152 = scmp.ne.s32.totalorder %s141, %s144
      %p153 = scmp.eq.s32.totalorder %s21, 1
      %p154 = por %p152, %p153
      %p155 = scmp.ne.s32.totalorder %s144, %s145
      %p156 = scmp.eq.s32.totalorder %s21, 0
      %p157 = por %p155, %p156
      %p158 = scmp.ne.s32.totalorder %s144, %s145
      %p159 = scmp.eq.s32.totalorder %s22, 1
      %p160 = por %p158, %p159
      %p162 = scmp.ne.s32.totalorder %s145, %s161
      %p163 = scmp.eq.s32.totalorder %s22, 0
      %p164 = por %p162, %p163
      %p165 = scmp.le.s32.totalorder 1, %s16
      %p166 = scmp.lt.s32.totalorder %s16, 3
      %p167 = pnand %p165, %p166
      %p168 = pneg %p167
      // Predicated region
      $region9: #{tpu_custom_call.1} parent=5 // pred_check
        _
      $region10: #{tpu_custom_call.1} parent=5 // pred_check_branch
        %170 = sbr.rel (%p167) target = $region12
      $region11: #{tpu_custom_call.1} parent=5 // pred_region
        %s171 = ssub.s32 %s16, 1
        // Predicated region
        $region13: #{tpu_custom_call.1} parent=11 // pred_check
          %p172 = pneg %p89
        $region14: #{tpu_custom_call.1} parent=11 // pred_check_branch
          %174 = sbr.rel (%p172) target = $region16
        $region15: #{tpu_custom_call.1} parent=11 // pred_region
          _
        $region16: #{tpu_custom_call.1} parent=11 // pred_fallthru
          _
        // Predicated region
        $region17: #{tpu_custom_call.1} parent=11 // pred_check
          %p175 = pneg %p110
        $region18: #{tpu_custom_call.1} parent=11 // pred_check_branch
          %177 = sbr.rel (%p175) target = $region20
        $region19: #{tpu_custom_call.1} parent=11 // pred_region
          %179 = vsyncadd [#allocation3], 0
          %s180 = sshll.u32 %s3, 4
          %s181 = int_to_ptr.hbm [resolvable:$true] %s180
          %s182 = sshll.u32 [#allocation2], 4
          %s183 = int_to_ptr.vmem [resolvable:$true] %s182
          %188 = dma.hbm_to_vmem [thread:$0]  %s181, 2048, %s183, [#allocation3], 128, 128, 8
        $region20: #{tpu_custom_call.1} parent=11 // pred_fallthru
          _
        // Predicated region
        $region21: #{tpu_custom_call.1} parent=11 // pred_check
          %p189 = pneg %p131
        $region22: #{tpu_custom_call.1} parent=11 // pred_check_branch
          %191 = sbr.rel (%p189) target = $region24
        $region23: #{tpu_custom_call.1} parent=11 // pred_region
          %193 = vsyncadd [#allocation6], 0
          %s195 = sshll.u32 %s4, 4
          %s196 = int_to_ptr.hbm [resolvable:$true] %s195
          %s197 = sshll.u32 [#allocation5], 4
          %s198 = int_to_ptr.vmem [resolvable:$true] %s197
          %200 = dma.hbm_to_vmem [thread:$0]  %s196, 128, %s198, [#allocation6]
        $region24: #{tpu_custom_call.1} parent=11 // pred_fallthru
          _
      $region12: #{tpu_custom_call.1} parent=5 // pred_fallthru
        _
      %p201 = scmp.lt.s32.totalorder %s16, 2
      // Predicated region
      $region25: #{tpu_custom_call.1} parent=5 // pred_check
        %p202 = pneg %p201
      $region26: #{tpu_custom_call.1} parent=5 // pred_check_branch
        %204 = sbr.rel (%p202) target = $region28
      $region27: #{tpu_custom_call.1} parent=5 // pred_region
        // Predicated region
        $region29: #{tpu_custom_call.1} parent=27 // pred_check
          %p205 = pneg %p36
        $region30: #{tpu_custom_call.1} parent=27 // pred_check_branch
          %207 = sbr.rel (%p205) target = $region32
        $region31: #{tpu_custom_call.1} parent=27 // pred_region
          %s208 = smul.u32 4, %s16
          %p209 = scmp.lt.s32.totalorder %s208, 7
          %s210 = scalar_select %p209, %s208, 7
          %s211 = smul.addr %s210, 8
          %s212 = scalar_lea.vmem %s0, %s211
          %s213 = smul.u32 4, %s16
        $region32: #{tpu_custom_call.1} parent=27 // pred_fallthru
          _
        // Predicated region
        $region33: #{tpu_custom_call.1} parent=27 // pred_check
          %p214 = pneg %p62
        $region34: #{tpu_custom_call.1} parent=27 // pred_check_branch
          %216 = sbr.rel (%p214) target = $region36
        $region35: #{tpu_custom_call.1} parent=27 // pred_region
          %s217 = smul.u32 2, %s16
          %p218 = scmp.lt.s32.totalorder %s217, 3
          %s219 = scalar_select %p218, %s217, 3
          %s220 = smul.addr %s219, 2
          %s221 = smul.addr %s220, 8
          %s222 = scalar_lea.vmem %s1, %s221
          %s223 = smul.u32 2, %s16
        $region36: #{tpu_custom_call.1} parent=27 // pred_fallthru
          _
      $region28: #{tpu_custom_call.1} parent=5 // pred_fallthru
        _
      %p224 = scmp.le.s32.totalorder 1, %s16
      %p225 = scmp.lt.s32.totalorder %s16, 3
      %p226 = pnand %p224, %p225
      %p227 = pneg %p226
      // Predicated region
      $region37: #{tpu_custom_call.1} parent=5 // pred_check
        _
      $region38: #{tpu_custom_call.1} parent=5 // pred_check_branch
        %229 = sbr.rel (%p226) target = $region40
      $region39: #{tpu_custom_call.1} parent=5 // pred_region
        %s230 = ssub.s32 %s16, 1
        // Predicated region
        $region41: #{tpu_custom_call.1} parent=39 // pred_check
          %p231 = pneg %p110
        $region42: #{tpu_custom_call.1} parent=39 // pred_check_branch
          %233 = sbr.rel (%p231) target = $region44
        $region43: #{tpu_custom_call.1} parent=39 // pred_region
          %235 = dma.done [#allocation3], 2048
        $region44: #{tpu_custom_call.1} parent=39 // pred_fallthru
          _
        // Predicated region
        $region45: #{tpu_custom_call.1} parent=39 // pred_check
          %p236 = pneg %p131
        $region46: #{tpu_custom_call.1} parent=39 // pred_check_branch
          %238 = sbr.rel (%p236) target = $region48
        $region47: #{tpu_custom_call.1} parent=39 // pred_region
          %240 = dma.done [#allocation6], 128
        $region48: #{tpu_custom_call.1} parent=39 // pred_fallthru
          _
        %s241 = smul.u32 4, %s21
        %p242 = scmp.lt.s32.totalorder %s241, 7
        %s243 = scalar_select %p242, %s241, 7
        %s244 = smul.addr %s243, 8
        %s245 = scalar_lea.vmem %s0, %s244
        %p246 = pneg %p42
        %p247 = pneg %p39
        %s248 = smul.u32 2, %s21
        %p249 = scmp.lt.s32.totalorder %s248, 3
        %s250 = scalar_select %p249, %s248, 3
        %s251 = smul.addr %s250, 2
        %s252 = smul.addr %s251, 8
        %s253 = scalar_lea.vmem %s1, %s252
        %p254 = pneg %p68
        %p255 = pneg %p65
        %p256 = pneg %p89
        %p257 = pneg %p86
        %p258 = pneg %p110
        %p259 = pneg %p107
        %p260 = pneg %p131
        %p261 = pneg %p128
        %p262 = pneg %p157
        %p263 = pneg %p154
        %s264 = sand.u32 %s144, 1
        %s265 = scalar_lea.sflag [#allocation4], %s264
        %s266 = sand.u32 %s144, 1
        %s267 = smul.addr %s266, 32
        %s268 = scalar_lea.vmem [#allocation7], %s267
        %s269 = smul.u32 4, %s21
        %p270 = scmp.lt.s32.totalorder %s269, 7
        %s271 = scalar_select %p270, %s269, 7
        %s272 = smul.addr %s271, 8
        %s273 = scalar_lea.vmem %s0, %s272
        %s274 = smul.u32 4, %s21
        %s275 = smul.u32 2, %s21
        %p276 = scmp.lt.s32.totalorder %s275, 3
        %s277 = scalar_select %p276, %s275, 3
        %s278 = smul.addr %s277, 2
        %s279 = smul.addr %s278, 8
        %s280 = scalar_lea.vmem %s1, %s279
        %s281 = smul.u32 2, %s21
        %s282 = smul.u32 4, %s21
        %v283 = vld [vmem:[#allocation5] sm:$0xff]
        %v284 = vlaneseq
        %v285 = vshrl.u32 %v284, 7
        %v286 = vadd.s32 %v285, 8
        %v287 = vlaneseq
        %v288 = vand.u32 %v287, 127
        %vm289 = vcmp.eq.s32.totalorder %v285, %v288
        %vm290 = vcmp.eq.s32.totalorder %v286, %v288
        %v291 = vld [vmem:[%s280] sm:$0xff]
        %v292 = vld [vmem:[%s280 + $0x8] sm:$0xff]
        %v293 = vld [vmem:[%s280 + $0x10] sm:$0xff]
        %v294 = vld [vmem:[%s280 + $0x18] sm:$0xff]
        %v295 = vsel %vm289, 1.0, %v291
        %v296 = vsel %vm290, 1.0, %v292
        %v297 = vsel %vm289, 1.0, %v293
        %v298 = vsel %vm290, 1.0, %v294
        %vm299 = vcmask 130048
        %v300 = vsel %vm299, %v295, 0.0
        %301 = vadd.xlane.f32.xlu0 %v300
        %v302 = vpop.xlane.xlu0 %301
        %v303 = vsel %vm299, %v296, 0.0
        %304 = vadd.xlane.f32.xlu0 %v303
        %v305 = vpop.xlane.xlu0 %304
        %v306 = vsel %vm299, %v297, 0.0
        %307 = vadd.xlane.f32.xlu0 %v306
        %v308 = vpop.xlane.xlu0 %307
        %v309 = vsel %vm299, %v298, 0.0
        %310 = vadd.xlane.f32.xlu0 %v309
        %v311 = vpop.xlane.xlu0 %310
        %v312 = vmax.f32 %v302, 1.0
        %v313 = vmax.f32 %v305, 1.0
        %v314 = vmax.f32 %v308, 1.0
        %v315 = vmax.f32 %v311, 1.0
        %v316 = vrsqrt.pop %v312
        %v317 = vmul.f32 %v316, %v312
        %v318 = vmul.f32 %v317, %v316
        %v319 = vmul.f32 0.5, %v318
        %v320 = vsub.f32 1.5, %v319
        %v321 = vmul.f32 %v316, %v320
        %vm322 = vweird.f32 %v312
        %vm323 = vweird.f32 %v316
        %vm324 = vmor %vm322, %vm323
        %v325 = vsel %vm324, %v316, %v321
        %v326 = vrsqrt.pop %v313
        %v327 = vmul.f32 %v326, %v313
        %v328 = vmul.f32 %v327, %v326
        %v329 = vmul.f32 0.5, %v328
        %v330 = vsub.f32 1.5, %v329
        %v331 = vmul.f32 %v326, %v330
        %vm332 = vweird.f32 %v313
        %vm333 = vweird.f32 %v326
        %vm334 = vmor %vm332, %vm333
        %v335 = vsel %vm334, %v326, %v331
        %v336 = vrsqrt.pop %v314
        %v337 = vmul.f32 %v336, %v314
        %v338 = vmul.f32 %v337, %v336
        %v339 = vmul.f32 0.5, %v338
        %v340 = vsub.f32 1.5, %v339
        %v341 = vmul.f32 %v336, %v340
        %vm342 = vweird.f32 %v314
        %vm343 = vweird.f32 %v336
        %vm344 = vmor %vm342, %vm343
        %v345 = vsel %vm344, %v336, %v341
        %v346 = vrsqrt.pop %v315
        %v347 = vmul.f32 %v346, %v315
        %v348 = vmul.f32 %v347, %v346
        %v349 = vmul.f32 0.5, %v348
        %v350 = vsub.f32 1.5, %v349
        %v351 = vmul.f32 %v346, %v350
        %vm352 = vweird.f32 %v315
        %vm353 = vweird.f32 %v346
        %vm354 = vmor %vm352, %vm353
        %v355 = vsel %vm354, %v346, %v351
        %v356 = vld [vmem:[%s273] sm:$0xff]
        %v357 = vld [vmem:[%s273 + $0x8] sm:$0xff]
        %v358 = vld [vmem:[%s273 + $0x10] sm:$0xff]
        %v359 = vld [vmem:[%s273 + $0x18] sm:$0xff]
        %v360 = vld [vmem:[%s2] sm:$0xff]
        %v361 = vld [vmem:[%s2 + $0x8] sm:$0xff]
        %v362 = vld [vmem:[%s2 + $0x10] sm:$0xff]
        %v363 = vld [vmem:[%s2 + $0x18] sm:$0xff]
        %vm364 = vcmask 261120
        %v366 = vsel %vm364, %v356, 0
        %v369 = vsel %vm364, %v357, 0
        %v372 = vsel %vm364, %v358, 0
        %v375 = vsel %vm364, %v359, 0
        %377 = vmatpush.msra.mxu0 0.0
        %378 = vmatpush.msra.mxu0 0.0
        %379 = vmatpush.msra.mxu0 0.0
        %380 = vmatpush.msra.mxu0 0.0
        %381 = vmatpush.msra.mxu0 0.0
        %382 = vmatpush.msra.mxu0 0.0
        %383 = vmatpush.msra.mxu0 0.0
        %384 = vmatpush.msra.mxu0 0.0
        %385 = vmatpush.msra.mxu0 0.0
        %386 = vmatpush.msra.mxu0 0.0
        %387 = vmatpush.msra.mxu0 0.0
        %388 = vmatpush.msra.mxu0 0.0
        %389 = vmatpush.msra.mxu0 %v363
        %390 = vmatpush.msra.mxu0 %v362
        %391 = vmatpush.msra.mxu0 %v361
        %392 = vmatpush.msra.mxu0 %v360
        %393 = vmatmul.f32.gmra.mxu0 %v366
        %v394 = vpop.f32.mrf.mxu0
        %v395 = vadd.f32 0.0, %v394
        %396 = vmatmul.f32.gmra.mxu0 %v369
        %v397 = vpop.f32.mrf.mxu0
        %v398 = vadd.f32 0.0, %v397
        %399 = vmatmul.f32.gmra.mxu0 %v372
        %v400 = vpop.f32.mrf.mxu0
        %v401 = vadd.f32 0.0, %v400
        %402 = vmatmul.f32.gmra.mxu0 %v375
        %v403 = vpop.f32.mrf.mxu0
        %v404 = vadd.f32 0.0, %v403
        %405 = vdwg.mxu0
        %v406 = vmul.f32 %v325, %v395
        %v407 = vmul.f32 %v335, %v398
        %v408 = vmul.f32 %v345, %v401
        %v409 = vmul.f32 %v355, %v404
        %v411 = vsel %vm299, %v295, 0
        %v414 = vsel %vm299, %v296, 0
        %416 = vmatpush.msra.mxu0 0.0
        %417 = vmatpush.msra.mxu0 0.0
        %418 = vmatpush.msra.mxu0 0.0
        %419 = vmatpush.msra.mxu0 0.0
        %420 = vmatpush.msra.mxu0 0.0
        %421 = vmatpush.msra.mxu0 0.0
        %422 = vmatpush.msra.mxu0 0.0
        %423 = vmatpush.msra.mxu0 0.0
        %424 = vmatpush.msra.mxu0 0.0
        %425 = vmatpush.msra.mxu0 0.0
        %426 = vmatpush.msra.mxu0 0.0
        %427 = vmatpush.msra.mxu0 0.0
        %428 = vmatpush.msra.mxu0 0.0
        %429 = vmatpush.msra.mxu0 0.0
        %430 = vmatpush.msra.mxu0 %v407
        %431 = vmatpush.msra.mxu0 %v406
        %432 = vmatmul.f32.gmra.mxu0 %v411
        %v433 = vpop.f32.mrf.mxu0
        %v434 = vadd.f32 0.0, %v433
        %435 = vmatmul.f32.gmra.mxu0 %v414
        %v436 = vpop.f32.mrf.mxu0
        %v437 = vadd.f32 0.0, %v436
        %438 = vdwg.mxu0
        %v440 = vsel %vm299, %v297, 0
        %v443 = vsel %vm299, %v298, 0
        %445 = vmatpush.msra.mxu0 0.0
        %446 = vmatpush.msra.mxu0 0.0
        %447 = vmatpush.msra.mxu0 0.0
        %448 = vmatpush.msra.mxu0 0.0
        %449 = vmatpush.msra.mxu0 0.0
        %450 = vmatpush.msra.mxu0 0.0
        %451 = vmatpush.msra.mxu0 0.0
        %452 = vmatpush.msra.mxu0 0.0
        %453 = vmatpush.msra.mxu0 0.0
        %454 = vmatpush.msra.mxu0 0.0
        %455 = vmatpush.msra.mxu0 0.0
        %456 = vmatpush.msra.mxu0 0.0
        %457 = vmatpush.msra.mxu0 0.0
        %458 = vmatpush.msra.mxu0 0.0
        %459 = vmatpush.msra.mxu0 %v409
        %460 = vmatpush.msra.mxu0 %v408
        %461 = vmatmul.f32.gmra.mxu0 %v440
        %v462 = vpop.f32.mrf.mxu0
        %v463 = vadd.f32 0.0, %v462
        %464 = vmatmul.f32.gmra.mxu0 %v443
        %v465 = vpop.f32.mrf.mxu0
        %v466 = vadd.f32 0.0, %v465
        %467 = vdwg.mxu0
        %v468 = vmul.f32 %v325, %v434
        %v469 = vmul.f32 %v335, %v437
        %v470 = vmul.f32 %v345, %v463
        %v471 = vmul.f32 %v355, %v466
        %v472 = vperm.slane %v283, 2
        %v473 = vadd.f32 %v468, %v472
        %v474 = vadd.f32 %v469, %v472
        %v475 = vadd.f32 %v470, %v472
        %v476 = vadd.f32 %v471, %v472
        %v477 = vadd.f32 %v473, %v474
        %v478 = vrot.slane %v477, 4
        %v479 = vadd.f32 %v477, %v478
        %v480 = vrot.slane %v479, 2
        %v481 = vadd.f32 %v479, %v480
        %v482 = vrot.slane %v481, 1
        %v483 = vadd.f32 %v481, %v482
        %v484 = vadd.f32 %v475, %v476
        %v485 = vrot.slane %v484, 4
        %v486 = vadd.f32 %v484, %v485
        %v487 = vrot.slane %v486, 2
        %v488 = vadd.f32 %v486, %v487
        %v489 = vrot.slane %v488, 1
        %v490 = vadd.f32 %v488, %v489
        %v491 = vrcp.pop 16.0
        %v492 = vmul.f32 16.0, %v491
        %v493 = vsub.f32 1.0, %v492
        %v494 = vmul.f32 %v491, %v493
        %v495 = vadd.f32 %v491, %v494
        %vm496 = vweird.f32 %v491
        %v497 = vsel %vm496, %v491, %v495
        %v498 = vmul.f32 %v483, %v497
        %v499 = vmul.f32 %v490, %v497
        %v500 = vsub.f32 %v473, %v498
        %v501 = vsub.f32 %v474, %v498
        %v502 = vsub.f32 %v475, %v499
        %v503 = vsub.f32 %v476, %v499
        %v504 = vmul.f32 %v500, %v500
        %v505 = vmul.f32 %v501, %v501
        %v506 = vmul.f32 %v502, %v502
        %v507 = vmul.f32 %v503, %v503
        %v508 = vadd.f32 %v504, %v505
        %v509 = vrot.slane %v508, 4
        %v510 = vadd.f32 %v508, %v509
        %v511 = vrot.slane %v510, 2
        %v512 = vadd.f32 %v510, %v511
        %v513 = vrot.slane %v512, 1
        %v514 = vadd.f32 %v512, %v513
        %v515 = vadd.f32 %v506, %v507
        %v516 = vrot.slane %v515, 4
        %v517 = vadd.f32 %v515, %v516
        %v518 = vrot.slane %v517, 2
        %v519 = vadd.f32 %v517, %v518
        %v520 = vrot.slane %v519, 1
        %v521 = vadd.f32 %v519, %v520
        %v522 = vmul.f32 %v514, %v497
        %v523 = vmul.f32 %v521, %v497
        %v524 = vperm.slane %v283, 0
        %v525 = vmul.f32 %v524, %v500
        %v526 = vmul.f32 %v524, %v501
        %v527 = vmul.f32 %v524, %v502
        %v528 = vmul.f32 %v524, %v503
        %v529 = vadd.f32 %v522, 1e-05
        %v530 = vadd.f32 %v523, 1e-05
        %v531 = vrsqrt.pop %v529
        %v532 = vmul.f32 %v531, %v529
        %v533 = vmul.f32 %v532, %v531
        %v534 = vmul.f32 0.5, %v533
        %v535 = vsub.f32 1.5, %v534
        %v536 = vmul.f32 %v531, %v535
        %vm537 = vweird.f32 %v529
        %vm538 = vweird.f32 %v531
        %vm539 = vmor %vm537, %vm538
        %v540 = vsel %vm539, %v531, %v536
        %v541 = vrsqrt.pop %v530
        %v542 = vmul.f32 %v541, %v530
        %v543 = vmul.f32 %v542, %v541
        %v544 = vmul.f32 0.5, %v543
        %v545 = vsub.f32 1.5, %v544
        %v546 = vmul.f32 %v541, %v545
        %vm547 = vweird.f32 %v530
        %vm548 = vweird.f32 %v541
        %vm549 = vmor %vm547, %vm548
        %v550 = vsel %vm549, %v541, %v546
        %v551 = vmul.f32 %v525, %v540
        %v552 = vmul.f32 %v526, %v540
        %v553 = vmul.f32 %v527, %v550
        %v554 = vmul.f32 %v528, %v550
        %v555 = vperm.slane %v283, 1
        %v556 = vadd.f32 %v551, %v555
        %v557 = vadd.f32 %v552, %v555
        %v558 = vadd.f32 %v553, %v555
        %v559 = vadd.f32 %v554, %v555
        %v560 = vmax.f32 %v556, 0.0
        %v561 = vmax.f32 %v557, 0.0
        %v562 = vmax.f32 %v558, 0.0
        %v563 = vmax.f32 %v559, 0.0
        %v564 = vld [vmem:[#allocation2] sm:$0xff]
        %v565 = vld [vmem:[#allocation2 + $0x8] sm:$0xff]
        %v566 = vld [vmem:[#allocation2 + $0x10] sm:$0xff]
        %v567 = vld [vmem:[#allocation2 + $0x18] sm:$0xff]
        %v568 = vld [vmem:[#allocation2 + $0x20] sm:$0xff]
        %v569 = vld [vmem:[#allocation2 + $0x28] sm:$0xff]
        %v570 = vld [vmem:[#allocation2 + $0x30] sm:$0xff]
        %v571 = vld [vmem:[#allocation2 + $0x38] sm:$0xff]
        %v572 = vld [vmem:[#allocation2 + $0x40] sm:$0xff]
        %v573 = vld [vmem:[#allocation2 + $0x48] sm:$0xff]
        %v574 = vld [vmem:[#allocation2 + $0x50] sm:$0xff]
        %v575 = vld [vmem:[#allocation2 + $0x58] sm:$0xff]
        %v576 = vld [vmem:[#allocation2 + $0x60] sm:$0xff]
        %v577 = vld [vmem:[#allocation2 + $0x68] sm:$0xff]
        %v578 = vld [vmem:[#allocation2 + $0x70] sm:$0xff]
        %v579 = vld [vmem:[#allocation2 + $0x78] sm:$0xff]
        %580 = vmatpush.msra.mxu0 %v579
        %581 = vmatpush.msra.mxu0 %v578
        %582 = vmatpush.msra.mxu0 %v577
        %583 = vmatpush.msra.mxu0 %v576
        %584 = vmatpush.msra.mxu0 %v575
        %585 = vmatpush.msra.mxu0 %v574
        %586 = vmatpush.msra.mxu0 %v573
        %587 = vmatpush.msra.mxu0 %v572
        %588 = vmatpush.msra.mxu0 %v571
        %589 = vmatpush.msra.mxu0 %v570
        %590 = vmatpush.msra.mxu0 %v569
        %591 = vmatpush.msra.mxu0 %v568
        %592 = vmatpush.msra.mxu0 %v567
        %593 = vmatpush.msra.mxu0 %v566
        %594 = vmatpush.msra.mxu0 %v565
        %595 = vmatpush.msra.mxu0 %v564
        %596 = vmatmul.f32.gmra.mxu0 %v560
        %v597 = vpop.f32.mrf.mxu0
        %v598 = vadd.f32 0.0, %v597
        %599 = vmatmul.f32.gmra.mxu0 %v561
        %v600 = vpop.f32.mrf.mxu0
        %v601 = vadd.f32 0.0, %v600
        %602 = vmatmul.f32.gmra.mxu0 %v562
        %v603 = vpop.f32.mrf.mxu0
        %v604 = vadd.f32 0.0, %v603
        %605 = vmatmul.f32.gmra.mxu0 %v563
        %v606 = vpop.f32.mrf.mxu0
        %v607 = vadd.f32 0.0, %v606
        %608 = vdwg.mxu0
        %v609 = vmul.f32 %v325, %v598
        %v610 = vmul.f32 %v335, %v601
        %v611 = vmul.f32 %v345, %v604
        %v612 = vmul.f32 %v355, %v607
        %613 = vmatpush.msra.mxu0 0.0
        %614 = vmatpush.msra.mxu0 0.0
        %615 = vmatpush.msra.mxu0 0.0
        %616 = vmatpush.msra.mxu0 0.0
        %617 = vmatpush.msra.mxu0 0.0
        %618 = vmatpush.msra.mxu0 0.0
        %619 = vmatpush.msra.mxu0 0.0
        %620 = vmatpush.msra.mxu0 0.0
        %621 = vmatpush.msra.mxu0 0.0
        %622 = vmatpush.msra.mxu0 0.0
        %623 = vmatpush.msra.mxu0 0.0
        %624 = vmatpush.msra.mxu0 0.0
        %625 = vmatpush.msra.mxu0 0.0
        %626 = vmatpush.msra.mxu0 0.0
        %627 = vmatpush.msra.mxu0 %v610
        %628 = vmatpush.msra.mxu0 %v609
        %629 = vmatmul.f32.gmra.mxu0 %v411
        %v630 = vpop.f32.mrf.mxu0
        %v631 = vadd.f32 0.0, %v630
        %632 = vmatmul.f32.gmra.mxu0 %v414
        %v633 = vpop.f32.mrf.mxu0
        %v634 = vadd.f32 0.0, %v633
        %635 = vdwg.mxu0
        %636 = vmatpush.msra.mxu0 0.0
        %637 = vmatpush.msra.mxu0 0.0
        %638 = vmatpush.msra.mxu0 0.0
        %639 = vmatpush.msra.mxu0 0.0
        %640 = vmatpush.msra.mxu0 0.0
        %641 = vmatpush.msra.mxu0 0.0
        %642 = vmatpush.msra.mxu0 0.0
        %643 = vmatpush.msra.mxu0 0.0
        %644 = vmatpush.msra.mxu0 0.0
        %645 = vmatpush.msra.mxu0 0.0
        %646 = vmatpush.msra.mxu0 0.0
        %647 = vmatpush.msra.mxu0 0.0
        %648 = vmatpush.msra.mxu0 0.0
        %649 = vmatpush.msra.mxu0 0.0
        %650 = vmatpush.msra.mxu0 %v612
        %651 = vmatpush.msra.mxu0 %v611
        %652 = vmatmul.f32.gmra.mxu0 %v440
        %v653 = vpop.f32.mrf.mxu0
        %v654 = vadd.f32 0.0, %v653
        %655 = vmatmul.f32.gmra.mxu0 %v443
        %v656 = vpop.f32.mrf.mxu0
        %v657 = vadd.f32 0.0, %v656
        %658 = vdwg.mxu0
        %v659 = vmul.f32 %v325, %v631
        %v660 = vmul.f32 %v335, %v634
        %v661 = vmul.f32 %v345, %v654
        %v662 = vmul.f32 %v355, %v657
        %v663 = vperm.slane %v283, 5
        %v664 = vadd.f32 %v659, %v663
        %v665 = vadd.f32 %v660, %v663
        %v666 = vadd.f32 %v661, %v663
        %v667 = vadd.f32 %v662, %v663
        %v668 = vadd.f32 %v664, %v665
        %v669 = vrot.slane %v668, 4
        %v670 = vadd.f32 %v668, %v669
        %v671 = vrot.slane %v670, 2
        %v672 = vadd.f32 %v670, %v671
        %v673 = vrot.slane %v672, 1
        %v674 = vadd.f32 %v672, %v673
        %v675 = vadd.f32 %v666, %v667
        %v676 = vrot.slane %v675, 4
        %v677 = vadd.f32 %v675, %v676
        %v678 = vrot.slane %v677, 2
        %v679 = vadd.f32 %v677, %v678
        %v680 = vrot.slane %v679, 1
        %v681 = vadd.f32 %v679, %v680
        %v682 = vmul.f32 %v674, %v497
        %v683 = vmul.f32 %v681, %v497
        %v684 = vsub.f32 %v664, %v682
        %v685 = vsub.f32 %v665, %v682
        %v686 = vsub.f32 %v666, %v683
        %v687 = vsub.f32 %v667, %v683
        %v688 = vmul.f32 %v684, %v684
        %v689 = vmul.f32 %v685, %v685
        %v690 = vmul.f32 %v686, %v686
        %v691 = vmul.f32 %v687, %v687
        %v692 = vadd.f32 %v688, %v689
        %v693 = vrot.slane %v692, 4
        %v694 = vadd.f32 %v692, %v693
        %v695 = vrot.slane %v694, 2
        %v696 = vadd.f32 %v694, %v695
        %v697 = vrot.slane %v696, 1
        %v698 = vadd.f32 %v696, %v697
        %v699 = vadd.f32 %v690, %v691
        %v700 = vrot.slane %v699, 4
        %v701 = vadd.f32 %v699, %v700
        %v702 = vrot.slane %v701, 2
        %v703 = vadd.f32 %v701, %v702
        %v704 = vrot.slane %v703, 1
        %v705 = vadd.f32 %v703, %v704
        %v706 = vmul.f32 %v698, %v497
        %v707 = vmul.f32 %v705, %v497
        %v708 = vperm.slane %v283, 3
        %v709 = vmul.f32 %v708, %v684
        %v710 = vmul.f32 %v708, %v685
        %v711 = vmul.f32 %v708, %v686
        %v712 = vmul.f32 %v708, %v687
        %v713 = vadd.f32 %v706, 1e-05
        %v714 = vadd.f32 %v707, 1e-05
        %v715 = vrsqrt.pop %v713
        %v716 = vmul.f32 %v715, %v713
        %v717 = vmul.f32 %v716, %v715
        %v718 = vmul.f32 0.5, %v717
        %v719 = vsub.f32 1.5, %v718
        %v720 = vmul.f32 %v715, %v719
        %vm721 = vweird.f32 %v713
        %vm722 = vweird.f32 %v715
        %vm723 = vmor %vm721, %vm722
        %v724 = vsel %vm723, %v715, %v720
        %v725 = vrsqrt.pop %v714
        %v726 = vmul.f32 %v725, %v714
        %v727 = vmul.f32 %v726, %v725
        %v728 = vmul.f32 0.5, %v727
        %v729 = vsub.f32 1.5, %v728
        %v730 = vmul.f32 %v725, %v729
        %vm731 = vweird.f32 %v714
        %vm732 = vweird.f32 %v725
        %vm733 = vmor %vm731, %vm732
        %v734 = vsel %vm733, %v725, %v730
        %v735 = vmul.f32 %v709, %v724
        %v736 = vmul.f32 %v710, %v724
        %v737 = vmul.f32 %v711, %v734
        %v738 = vmul.f32 %v712, %v734
        %v739 = vperm.slane %v283, 4
        %v740 = vadd.f32 %v735, %v739
        %v741 = vadd.f32 %v736, %v739
        %v742 = vadd.f32 %v737, %v739
        %v743 = vadd.f32 %v738, %v739
        %744 = vst [vmem:[%s268] sm:$0xff] %v740
        %745 = vst [vmem:[%s268 + $0x8] sm:$0xff] %v741
        %746 = vst [vmem:[%s268 + $0x10] sm:$0xff] %v742
        %747 = vst [vmem:[%s268 + $0x18] sm:$0xff] %v743
        %s748 = sand.u32 %s144, 1
        %s749 = scalar_lea.sflag [#allocation4], %s748
        %s750 = sand.u32 %s144, 1
        %s751 = smul.addr %s750, 32
        %s752 = scalar_lea.vmem [#allocation7], %s751
        // Predicated region
        $region49: #{tpu_custom_call.1} parent=39 // pred_check
          %p753 = pneg %p154
        $region50: #{tpu_custom_call.1} parent=39 // pred_check_branch
          %755 = sbr.rel (%p753) target = $region52
        $region51: #{tpu_custom_call.1} parent=39 // pred_region
          %s756 = smul.u32 4, %s21
          %758 = vsyncadd %s749, 0
          %s759 = smul.addr %s756, 8
          %s760 = scalar_lea.hbm %s5, %s759
          %s761 = sshll.u32 %s752, 4
          %s762 = int_to_ptr.vmem [resolvable:$true] %s761
          %s763 = sshll.u32 %s760, 4
          %s764 = int_to_ptr.hbm [resolvable:$true] %s763
          %769 = dma.vmem_to_hbm [thread:$0]  %s762, 512, %s764, %s749, 128, 128, 8
        $region52: #{tpu_custom_call.1} parent=39 // pred_fallthru
          _
      $region40: #{tpu_custom_call.1} parent=5 // pred_fallthru
        _
      %p770 = scmp.le.s32.totalorder 2, %s16
      // Predicated region
      $region53: #{tpu_custom_call.1} parent=5 // pred_check
        %p771 = pneg %p770
      $region54: #{tpu_custom_call.1} parent=5 // pred_check_branch
        %773 = sbr.rel (%p771) target = $region56
      $region55: #{tpu_custom_call.1} parent=5 // pred_region
        %s774 = ssub.s32 %s16, 2
        // Predicated region
        $region57: #{tpu_custom_call.1} parent=55 // pred_check
          %p775 = pneg %p160
        $region58: #{tpu_custom_call.1} parent=55 // pred_check_branch
          %777 = sbr.rel (%p775) target = $region60
        $region59: #{tpu_custom_call.1} parent=55 // pred_region
          %s778 = sand.u32 %s145, 1
          %s779 = scalar_lea.sflag [#allocation4], %s778
          %s780 = sand.u32 %s145, 1
          %s781 = smul.addr %s780, 32
          %s782 = scalar_lea.vmem [#allocation7], %s781
          %784 = dma.done %s779, 512
        $region60: #{tpu_custom_call.1} parent=55 // pred_fallthru
          _
      $region56: #{tpu_custom_call.1} parent=5 // pred_fallthru
        _
    $region6: #{tpu_custom_call.1} parent=1 // loop_footer
      %s20 = sadd.s32 1, %s16
    $region7: #{tpu_custom_call.1} parent=1 // loop_footer_branch
      %15 = sbr.rel target = $region3
    $region8: #{tpu_custom_call.1} parent=1 // loop_exit
      _
    %785 = vsyncpa [#allocation3], 1
    %s786 = scalar_lea.sflag [#allocation3], 1
    %787 = vsyncpa %s786, 1
    %788 = vsyncpa [#allocation6], 1
    %789 = vsyncpa [#allocation4], 1
    %s790 = scalar_lea.sflag [#allocation4], 1
    %791 = vsyncpa %s790, 1

</llo_original>
